<compile_context>
chip_gen: v7x
topology: tpu7x:2x2x1
jax: 0.10.0
libtpu: 0.0.40
codegen_flags: <defaults>
</compile_context>

<pallas_src>
import functools

import jax
import jax.numpy as jnp
from jax.experimental import pallas as pl
from jax.experimental.pallas import tpu as pltpu


def _round_up(v, m):
    return ((v + m - 1) // m) * m


def _domain_classifier_kernel(x_ref, w1_ref, b1_ref, w2_ref, b2_ref, out_ref,
                              acc_ref, *, hw_true, hw_tile, inv_hw, need_mask):
    """One grid step: accumulate spatial sum; run the MLP on the last HW tile.

    x_ref  : (b_tile, C, hw_tile)  current spatial slab of the feature map
    w1_ref : (C, hidden)    b1_ref: (1, hidden)
    w2_ref : (hidden, 2)    b2_ref: (1, 2)
    out_ref: (b_tile, 2)
    acc_ref: (b_tile, C) f32 scratch -- running spatial sum
    """
    hw_idx = pl.program_id(1)

    # Reset the accumulator at the start of every spatial reduction
    # (the scratch persists across grid iterations / batch blocks).
    @pl.when(hw_idx == 0)
    def _():
        acc_ref[...] = jnp.zeros_like(acc_ref)

    x = x_ref[...].astype(jnp.float32)                       # (b_tile, C, hw_tile)

    if need_mask:
        # Ragged last spatial tile: Pallas fills the out-of-bounds tail of an
        # edge block with undefined values -- zero them before summing.  The
        # compare/select is pure VPU work, fully hidden under the HBM stream.
        lane = jax.lax.broadcasted_iota(jnp.int32, x.shape, dimension=2)
        x = jnp.where(lane + hw_idx * hw_tile < hw_true, x, 0.0)

    # Spatial SUM of this tile, accumulated in f32.  The 1/(H*W) scale is
    # applied once at finalize, not per tile.
    acc_ref[...] += jnp.sum(x, axis=-1)

    # Finalize: mean -> (GRL = identity in forward) -> Linear/ReLU/Linear.
    # Runs exactly once per batch block, on the last spatial tile only.
    @pl.when(hw_idx == pl.num_programs(1) - 1)
    def _():
        pooled = acc_ref[...] * inv_hw                       # (b_tile, C)
        # TODO(synk): GradientReversalLayer only affects the backward pass; to
        # train through this kernel, wrap the call in jax.custom_vjp that
        # negates/scales the incoming cotangent (forward here is identity).
        h = jnp.dot(pooled, w1_ref[...],
                    preferred_element_type=jnp.float32) + b1_ref[...]
        h = jnp.maximum(h, 0.0)                              # ReLU
        out = jnp.dot(h, w2_ref[...],
                      preferred_element_type=jnp.float32) + b2_ref[...]
        out_ref[...] = out.astype(out_ref.dtype)


def _vmem_capacity_bytes():
    # Generation-aware physical VMEM (v5e/v6e: 128 MiB, v7x: 64 MiB per TC).
    try:
        return int(pltpu.get_tpu_info().vmem_capacity_bytes)
    except Exception:
        return 64 * 1024 * 1024  # conservative (v7x) fallback


def _choose_hw_tile(hw, channels, b_tile, itemsize, x_block_cap):
    """Largest legal spatial tile whose single VMEM buffer fits x_block_cap.

    Returns either the full extent `hw` (legal even when hw % 128 != 0 because
    a block dim equal to the array dim is exempt from the (8,128) rule), or a
    multiple of 128; the ragged remainder is handled by a cdiv grid plus an
    in-kernel mask -- never by a jnp.pad copy of x in HBM.
    """
    # VMEM layout pads the block's last two dims (C -> mult of 8, hw -> 128).
    bytes_per_lane = b_tile * _round_up(channels, 8) * itemsize
    hw_padded = _round_up(hw, 128)
    if hw_padded * bytes_per_lane <= x_block_cap:
        return hw                                            # one block, no mask
    lanes128 = max(1, x_block_cap // (bytes_per_lane * 128))
    lanes128 = min(lanes128, hw_padded // 128)
    return lanes128 * 128


def _choose_tiles(B, C, hw, itemsize, x_block_cap):
    """Jointly pick (b_tile, hw_tile).

    Legality: the (b_tile, 2) output block needs b_tile == B or b_tile % 8 == 0,
    and b_tile must divide B (no batch tail to mask).
    Preference order: wide spatial tiles (>= 512 lanes or full extent, the big
    HBM-bandwidth lever) > at least 2 batch blocks (feeds both v7x TensorCores)
    > larger b_tile (amortizes per-step overhead).
    """
    candidates = sorted({B} | {b for b in range(8, B, 8) if B % b == 0},
                        reverse=True)
    target_lanes = min(_round_up(hw, 128), 512)

    best = None
    for bt in candidates:
        ht = _choose_hw_tile(hw, C, bt, itemsize, x_block_cap)
        lane_ok = (ht == hw) or (ht >= target_lanes)
        two_blocks = (B // bt) >= 2
        score = (lane_ok, two_blocks, bt)
        if best is None or score > best[0]:
            best = (score, bt, ht)
    return best[1], best[2]


def image_level_domain_classifier(x, w1, b1, w2, b2):
    """
    Args:
      x : (B, C, H, W) float32, NCHW (PyTorch convention)
      w1: (hidden, C)  float32  -- PyTorch nn.Linear weight layout (out, in)
      b1: (hidden,)    float32
      w2: (2, hidden)  float32
      b2: (2,)         float32
    Returns:
      (B, 2) float32 domain logits.
    """
    B, C, H, W = x.shape
    hidden = w1.shape[0]
    hw = H * W

    # Flatten spatial dims only (metadata reshape; NO padding copy of x).
    x_flat = x.reshape(B, C, hw)
    itemsize = x_flat.dtype.itemsize

    vmem_cap = _vmem_capacity_bytes()

    # Resident weight / bias footprint (VMEM-padded, x2 for pipeline buffers).
    w_bytes = (_round_up(C, 8) * _round_up(hidden, 128)        # w1_t
               + 8 * _round_up(hidden, 128)                    # b1
               + _round_up(hidden, 8) * 128                    # w2_t
               + 8 * 128) * 4                                  # b2
    slack = 4 << 20
    # Per-buffer x block cap: leave room for 2 x buffers + weights + headroom,
    # never below 2 MiB.  (128 MiB chips => big tiles; 64 MiB v7x stays tight.)
    x_block_cap = max(2 << 20, (vmem_cap - 2 * w_bytes - slack) // 3)

    b_tile, hw_tile = _choose_tiles(B, C, hw, itemsize, x_block_cap)
    grid_hw = pl.cdiv(hw, hw_tile)
    need_mask = (hw % hw_tile) != 0
    grid = (B // b_tile, grid_hw)

    # Present weights as (in, out) and biases as 2-D rows for the kernel.
    # TODO(synk): on v7x, storing w1_t/w2_t as bfloat16 halves the resident
    # weight footprint (kept f32 here to match the f32 reference exactly).
    w1_t = jnp.transpose(w1)            # (C, hidden)
    w2_t = jnp.transpose(w2)            # (hidden, 2)
    b1_2d = b1.reshape(1, hidden)
    b2_2d = b2.reshape(1, 2)

    kernel = functools.partial(
        _domain_classifier_kernel,
        hw_true=hw, hw_tile=hw_tile, inv_hw=1.0 / float(hw), need_mask=need_mask)

    # VMEM-padded per-buffer sizes (for the vmem limit derivation below).
    x_block_bytes = b_tile * _round_up(C, 8) * _round_up(hw_tile, 128) * itemsize
    acc_bytes = _round_up(b_tile, 8) * _round_up(C, 128) * 4
    out_block_bytes = _round_up(b_tile, 8) * 128 * 4

    # Deeper buffering only when tiles are forced small (hides per-step DMA
    # issue latency); default double-buffering for big tiles.
    if grid_hw >= 3 and x_block_bytes < (1 << 20) and hasattr(pl, "Buffered"):
        x_spec = pl.BlockSpec((b_tile, C, hw_tile), lambda i, j: (i, 0, j),
                              pipeline_mode=pl.Buffered(3))
        n_x_bufs = 3
    else:
        x_spec = pl.BlockSpec((b_tile, C, hw_tile), lambda i, j: (i, 0, j))
        n_x_bufs = 2

    # VMEM budget derived from the actual buffers instead of a hard constant;
    # clamp to the chip's physical capacity (v5e's scoped default is only
    # 16 MiB, so the explicit override stays).
    vmem_limit = (n_x_bufs * x_block_bytes + 2 * w_bytes + acc_bytes
                  + 2 * out_block_bytes + slack)
    vmem_limit = int(min(max(vmem_limit, 32 << 20), vmem_cap))

    # Free scheduling hint for XLA around the custom call.
    cost = pl.CostEstimate(
        flops=int(2 * B * C * hw + 2 * B * C * hidden + 4 * B * hidden),
        transcendentals=0,
        bytes_accessed=int(x_flat.size * itemsize
                           + (w1.size + b1.size + w2.size + b2.size) * 4
                           + B * 2 * 4),
    )

    return pl.pallas_call(
        kernel,
        out_shape=jax.ShapeDtypeStruct((B, 2), jnp.float32),
        grid_spec=pltpu.PrefetchScalarGridSpec(
            num_scalar_prefetch=0,
            grid=grid,
            in_specs=[
                # x: tiled over (batch block, spatial block); pipelined.
                x_spec,
                # Weights/biases: full blocks, constant index -> DMA'd once,
                # stay resident in VMEM across the whole grid.
                pl.BlockSpec((C, hidden), lambda i, j: (0, 0)),
                pl.BlockSpec((1, hidden), lambda i, j: (0, 0)),
                pl.BlockSpec((hidden, 2), lambda i, j: (0, 0)),
                pl.BlockSpec((1, 2), lambda i, j: (0, 0)),
            ],
            out_specs=pl.BlockSpec((b_tile, 2), lambda i, j: (i, 0)),
            scratch_shapes=[pltpu.VMEM((b_tile, C), jnp.float32)],
        ),
        compiler_params=pltpu.CompilerParams(
            dimension_semantics=("parallel", "arbitrary"),
            vmem_limit_bytes=vmem_limit,
        ),
        cost_estimate=cost,
    )(x_flat, w1_t, b1_2d, w2_t, b2_2d)


def _reference(x, w1, b1, w2, b2):
    pooled = jnp.mean(x, axis=(2, 3))
    h = jnp.maximum(pooled @ w1.T + b1, 0.0)
    return h @ w2.T + b2


if __name__ == "__main__":
    B, C, H, W = 2, 4, 16, 16
    hidden = 32

    key = jax.random.PRNGKey(0)
    kx, kw1, kb1, kw2, kb2 = jax.random.split(key, 5)

    x = jax.random.normal(kx, (B, C, H, W), dtype=jnp.float32)
    # Deterministic parameter init (matching nn.Linear shapes: weight (out, in)).
    w1 = jax.random.normal(kw1, (hidden, C), dtype=jnp.float32) * 0.1
    b1 = jax.random.normal(kb1, (hidden,), dtype=jnp.float32) * 0.01
    w2 = jax.random.normal(kw2, (2, hidden), dtype=jnp.float32) * 0.1
    b2 = jax.random.normal(kb2, (2,), dtype=jnp.float32) * 0.01

    out = image_level_domain_classifier(x, w1, b1, w2, b2)
    out = jax.block_until_ready(out)

    ref = _reference(x, w1, b1, w2, b2)
    assert out.shape == (B, 2)
    assert jnp.allclose(out, ref, atol=1e-5, rtol=1e-5), (out, ref)

    print("KERNEL_OK")
</pallas_src>

<mosaic_0001>
module attributes {stable_mosaic.version = 11 : i64} {
  func.func @_domain_classifier_kernel(%arg0: i32, %arg1: i32, %arg2: memref<2x4x256xf32, #tpu.memory_space<vmem>>, %arg3: memref<4x32xf32, #tpu.memory_space<vmem>>, %arg4: memref<1x32xf32, #tpu.memory_space<vmem>>, %arg5: memref<32x2xf32, #tpu.memory_space<vmem>>, %arg6: memref<1x2xf32, #tpu.memory_space<vmem>>, %arg7: memref<2x2xf32, #tpu.memory_space<vmem>>, %arg8: memref<2x4xf32, #tpu.memory_space<vmem>>) attributes {dimension_semantics = [#tpu.dimension_semantics<parallel>, #tpu.dimension_semantics<arbitrary>], iteration_bounds = array<i64: 1, 1>, scalar_prefetch = 0 : i64, scratch_operands = 1 : i64, tpu.core_type = #tpu.core_type<tc>, window_params = [{transform_indices = @transform_0, window_bounds = array<i64: 2, 4, 256>}, {pipeline_mode = #tpu.pipeline_mode<synchronous>, transform_indices = @transform_1, window_bounds = array<i64: 4, 32>}, {pipeline_mode = #tpu.pipeline_mode<synchronous>, transform_indices = @transform_2, window_bounds = array<i64: 1, 32>}, {pipeline_mode = #tpu.pipeline_mode<synchronous>, transform_indices = @transform_3, window_bounds = array<i64: 32, 2>}, {pipeline_mode = #tpu.pipeline_mode<synchronous>, transform_indices = @transform_4, window_bounds = array<i64: 1, 2>}, {transform_indices = @transform_5, window_bounds = array<i64: 2, 2>}]} {
    %c0_i32 = arith.constant 0 : i32
    %0 = arith.cmpi eq, %arg1, %c0_i32 : i32
    %1 = arith.extui %0 : i1 to i32
    %c0_i32_0 = arith.constant 0 : i32
    %2 = arith.cmpi ne, %1, %c0_i32_0 : i32
    scf.if %2 {
      %cst_9 = arith.constant 0.000000e+00 : f32
      %11 = vector.broadcast %cst_9 : f32 to vector<2x4xf32>
      %c0_10 = arith.constant 0 : index
      %c0_11 = arith.constant 0 : index
      %12 = vector.load %arg8[%c0_10, %c0_11] : memref<2x4xf32, #tpu.memory_space<vmem>>, vector<2x4xf32>
      tpu.vector_store %arg8[%c0_10, %c0_11], %11 {strides = array<i32>} : memref<2x4xf32, #tpu.memory_space<vmem>>, vector<2x4xf32>,
    } else {
    }
    %c0 = arith.constant 0 : index
    %c0_1 = arith.constant 0 : index
    %c0_2 = arith.constant 0 : index
    %3 = vector.load %arg2[%c0, %c0_1, %c0_2] : memref<2x4x256xf32, #tpu.memory_space<vmem>>, vector<2x4x256xf32>
    %c0_3 = arith.constant 0 : index
    %c0_4 = arith.constant 0 : index
    %4 = vector.load %arg8[%c0_3, %c0_4] : memref<2x4xf32, #tpu.memory_space<vmem>>, vector<2x4xf32>
    %cst = arith.constant dense<0.000000e+00> : vector<2x4xf32>
    %5 = vector.multi_reduction <add>, %3, %cst [2] : vector<2x4x256xf32> to vector<2x4xf32>
    %6 = arith.addf %4, %5 : vector<2x4xf32>
    %c0_5 = arith.constant 0 : index
    %c0_6 = arith.constant 0 : index
    %7 = vector.load %arg8[%c0_5, %c0_6] : memref<2x4xf32, #tpu.memory_space<vmem>>, vector<2x4xf32>
    tpu.vector_store %arg8[%c0_5, %c0_6], %6 {strides = array<i32>} : memref<2x4xf32, #tpu.memory_space<vmem>>, vector<2x4xf32>,
    %c0_i32_7 = arith.constant 0 : i32
    %8 = arith.cmpi eq, %arg1, %c0_i32_7 : i32
    %9 = arith.extui %8 : i1 to i32
    %c0_i32_8 = arith.constant 0 : i32
    %10 = arith.cmpi ne, %9, %c0_i32_8 : i32
    scf.if %10 {
      %c0_9 = arith.constant 0 : index
      %c0_10 = arith.constant 0 : index
      %11 = vector.load %arg8[%c0_9, %c0_10] : memref<2x4xf32, #tpu.memory_space<vmem>>, vector<2x4xf32>
      %cst_11 = arith.constant 3.906250e-03 : f32
      %12 = vector.broadcast %cst_11 : f32 to vector<2x4xf32>
      %13 = arith.mulf %11, %12 : vector<2x4xf32>
      %c0_12 = arith.constant 0 : index
      %c0_13 = arith.constant 0 : index
      %14 = vector.load %arg3[%c0_12, %c0_13] : memref<4x32xf32, #tpu.memory_space<vmem>>, vector<4x32xf32>
      %cst_14 = arith.constant dense<0.000000e+00> : vector<2x32xf32>
      %15 = tpu.matmul %13, %14, %cst_14 {dimension_numbers = #tpu.dot_dimension_numbers<[1], [0], [0], [1], [0, 0, 1, 1], [], []>} : vector<2x4xf32>, vector<4x32xf32>, vector<2x32xf32> -> vector<2x32xf32>
      %c0_15 = arith.constant 0 : index
      %c0_16 = arith.constant 0 : index
      %16 = vector.load %arg4[%c0_15, %c0_16] : memref<1x32xf32, #tpu.memory_space<vmem>>, vector<1x32xf32>
      %17 = vector.broadcast %16 : vector<1x32xf32> to vector<2x32xf32>
      %18 = arith.addf %15, %17 : vector<2x32xf32>
      %cst_17 = arith.constant 0.000000e+00 : f32
      %19 = vector.broadcast %cst_17 : f32 to vector<2x32xf32>
      %20 = arith.maximumf %18, %19 : vector<2x32xf32>
      %c0_18 = arith.constant 0 : index
      %c0_19 = arith.constant 0 : index
      %21 = vector.load %arg5[%c0_18, %c0_19] : memref<32x2xf32, #tpu.memory_space<vmem>>, vector<32x2xf32>
      %cst_20 = arith.constant dense<0.000000e+00> : vector<2x2xf32>
      %22 = tpu.matmul %20, %21, %cst_20 {dimension_numbers = #tpu.dot_dimension_numbers<[1], [0], [0], [1], [0, 0, 1, 1], [], []>} : vector<2x32xf32>, vector<32x2xf32>, vector<2x2xf32> -> vector<2x2xf32>
      %c0_21 = arith.constant 0 : index
      %c0_22 = arith.constant 0 : index
      %23 = vector.load %arg6[%c0_21, %c0_22] : memref<1x2xf32, #tpu.memory_space<vmem>>, vector<1x2xf32>
      %24 = vector.broadcast %23 : vector<1x2xf32> to vector<2x2xf32>
      %25 = arith.addf %22, %24 : vector<2x2xf32>
      %c0_23 = arith.constant 0 : index
      %c0_24 = arith.constant 0 : index
      %26 = vector.load %arg7[%c0_23, %c0_24] : memref<2x2xf32, #tpu.memory_space<vmem>>, vector<2x2xf32>
      tpu.vector_store %arg7[%c0_23, %c0_24], %25 {strides = array<i32>} : memref<2x2xf32, #tpu.memory_space<vmem>>, vector<2x2xf32>,
    } else {
    }
    return
  }
  func.func @transform_0(%arg0: i32, %arg1: i32) -> (i32, i32, i32) {
    %c0_i32 = arith.constant 0 : i32
    %c0_i32_0 = arith.constant 0 : i32
    return %arg0, %c0_i32, %arg1 : i32, i32, i32
  }
  func.func @transform_1(%arg0: i32, %arg1: i32) -> (i32, i32) {
    %c0_i32 = arith.constant 0 : i32
    %c0_i32_0 = arith.constant 0 : i32
    %c0_i32_1 = arith.constant 0 : i32
    return %c0_i32, %c0_i32_0 : i32, i32
  }
  func.func @transform_2(%arg0: i32, %arg1: i32) -> (i32, i32) {
    %c0_i32 = arith.constant 0 : i32
    %c0_i32_0 = arith.constant 0 : i32
    %c0_i32_1 = arith.constant 0 : i32
    return %c0_i32, %c0_i32_0 : i32, i32
  }
  func.func @transform_3(%arg0: i32, %arg1: i32) -> (i32, i32) {
    %c0_i32 = arith.constant 0 : i32
    %c0_i32_0 = arith.constant 0 : i32
    %c0_i32_1 = arith.constant 0 : i32
    return %c0_i32, %c0_i32_0 : i32, i32
  }
  func.func @transform_4(%arg0: i32, %arg1: i32) -> (i32, i32) {
    %c0_i32 = arith.constant 0 : i32
    %c0_i32_0 = arith.constant 0 : i32
    %c0_i32_1 = arith.constant 0 : i32
    return %c0_i32, %c0_i32_0 : i32, i32
  }
  func.func @transform_5(%arg0: i32, %arg1: i32) -> (i32, i32) {
    %c0_i32 = arith.constant 0 : i32
    %c0_i32_0 = arith.constant 0 : i32
    return %arg0, %c0_i32 : i32, i32
  }
}

</mosaic_0001>

<llo_original>
// kernel: tpu_custom_call.1
$region0: #{tpu_custom_call.1}
  #allocation0 [shape = 'u32[]', space=smem, size = 0x4, offset = 0x4, fixed_abs, tag = 'smem constant byte address 0x4 - core index']
  #allocation1 [shape = 'u32[144,128]{1,0:T(1,128)}', space=vmem, size = 0x12000, scoped, tag = 'internal scratch']
  #allocation2 [shape = 'f32[2,4]{1,0:T(2,128)}', space=vmem, size = 0x400, scoped, tag = 'scratch operand']
  %s0 = inlined_call_operand.vmem [shape: f32[2,4,256], index: 0, kind: input, shape index: {}]
  %s1 = inlined_call_operand.vmem [shape: f32[4,32], index: 1, kind: input, shape index: {}]
  %s2 = inlined_call_operand.vmem [shape: f32[1,32], index: 2, kind: input, shape index: {}]
  %s3 = inlined_call_operand.vmem [shape: f32[32,2], index: 3, kind: input, shape index: {}]
  %s4 = inlined_call_operand.vmem [shape: f32[1,2], index: 4, kind: input, shape index: {}]
  %s5 = inlined_call_operand.hbm [shape: f32[2,2], index: 5, kind: output, shape index: {}]
  %s6 = sld [smem:[#allocation0]]
  $region38: #{tpu_custom_call.1} parent=0
    _
  %s8 = ssub.s32 1, %s6
  %s9 = scalar_select 0, %s8, %s6
  $region1: #{tpu_custom_call.1} parent=0
    #allocation3 [shape = 'u8[1024]{0}', space=vmem, size = 0x400, scoped, tag = 'output window, operand 0, single buffered']
    #allocation4 [shape = 's32[1]{0}', space=sflag, size = 0x4, scoped, tag = 'scoped memory for tpu_custom_call.1']
    %10 = vsyncpa [#allocation4], 0
    // Predicated region
    $region2: #{tpu_custom_call.1} parent=1 // pred_check
      _
    $region3: #{tpu_custom_call.1} parent=1 // pred_check_branch
      %12 = sbr.rel (0) target = $region5
    $region4: #{tpu_custom_call.1} parent=1 // pred_region
      _
    $region5: #{tpu_custom_call.1} parent=1 // pred_fallthru
      _
    // Predicated region
    $region6: #{tpu_custom_call.1} parent=1 // pred_check
      _
    $region7: #{tpu_custom_call.1} parent=1 // pred_check_branch
      %14 = sbr.rel (0) target = $region9
    $region8: #{tpu_custom_call.1} parent=1 // pred_region
      _
    $region9: #{tpu_custom_call.1} parent=1 // pred_fallthru
      _
    // Predicated region
    $region10: #{tpu_custom_call.1} parent=1 // pred_check
      _
    $region11: #{tpu_custom_call.1} parent=1 // pred_check_branch
      %16 = sbr.rel (0) target = $region13
    $region12: #{tpu_custom_call.1} parent=1 // pred_region
      _
    $region13: #{tpu_custom_call.1} parent=1 // pred_fallthru
      _
    // Predicated region
    $region14: #{tpu_custom_call.1} parent=1 // pred_check
      _
    $region15: #{tpu_custom_call.1} parent=1 // pred_check_branch
      %18 = sbr.rel (0) target = $region17
    $region16: #{tpu_custom_call.1} parent=1 // pred_region
      _
    $region17: #{tpu_custom_call.1} parent=1 // pred_fallthru
      _
    // Predicated region
    $region18: #{tpu_custom_call.1} parent=1 // pred_check
      _
    $region19: #{tpu_custom_call.1} parent=1 // pred_check_branch
      %20 = sbr.rel (0) target = $region21
    $region20: #{tpu_custom_call.1} parent=1 // pred_region
      _
    $region21: #{tpu_custom_call.1} parent=1 // pred_fallthru
      _
    %p21 = scmp.eq.s32.totalorder 0, 0
    // Predicated region
    $region22: #{tpu_custom_call.1} parent=1 // pred_check
      %p22 = pneg %p21
    $region23: #{tpu_custom_call.1} parent=1 // pred_check_branch
      %24 = sbr.rel (%p22) target = $region25
    $region24: #{tpu_custom_call.1} parent=1 // pred_region
      %vm25 = vcmask 25600
      %26 = vst.msk [vmem:[#allocation2] sm:$0x3] %vm25, 0.0
    $region25: #{tpu_custom_call.1} parent=1 // pred_fallthru
      _
    %v27 = vld [vmem:[%s0] sm:$0xff]
    %v28 = vld [vmem:[%s0 + $0x8] sm:$0xff]
    %v29 = vld [vmem:[#allocation2] sm:$0x3]
    %v32 = vcombine.high %v27, %v27
    %v33 = vcombine.high %v28, %v28
    %vm36 = vcmask 1043456
    %v37 = vsel %vm36, %v27, 0.0
    %v38 = vsel %vm36, %v32, 0.0
    %v39 = vadd.f32 %v37, %v38
    %40 = vadd.xlane.f32.xlu0 %v39
    %v41 = vpop.xlane.xlu0 %40
    %v42 = vsel %vm36, %v28, 0.0
    %v43 = vsel %vm36, %v33, 0.0
    %v44 = vadd.f32 %v42, %v43
    %45 = vadd.xlane.f32.xlu0 %v44
    %v46 = vpop.xlane.xlu0 %45
    %v49 = vlaneseq
    %v50 = vand.u32 %v49, 127
    %v51 = vlaneseq
    %v52 = vshrl.u32 %v51, 7
    %v53 = vsub.s32 %v50, %v52
    %v54 = vrot.slane %v41, %v53
    %v55 = vlaneseq
    %v56 = vshrl.u32 %v55, 7
    %v57 = vsub.s32 %v50, %v56
    %v58 = vrot.slane %v46, %v57
    %vm59 = vcmask 1041409
    %v60 = vsel %vm59, %v58, %v54
    %v62 = vadd.f32 %v29, %v60
    %vm63 = vcmask 25600
    %64 = vst.msk [vmem:[#allocation2] sm:$0x3] %vm63, %v62
    // Predicated region
    $region26: #{tpu_custom_call.1} parent=1 // pred_check
      %p65 = pneg %p21
    $region27: #{tpu_custom_call.1} parent=1 // pred_check_branch
      %67 = sbr.rel (%p65) target = $region29
    $region28: #{tpu_custom_call.1} parent=1 // pred_region
      %v68 = vld [vmem:[#allocation2] sm:$0x3]
      %v69 = vmul.f32 %v68, 0.00390625
      %v70 = vld [vmem:[%s1] sm:$0xf]
      %v71 = vld [vmem:[%s2] sm:$0x1]
      %v73 = vlaneseq
      %v74 = vshrl.u32 %v73, 7
      %v75 = vsub.s32 0, %v74
      %v76 = vrot.slane %v71, %v75
      %vm78 = vcmask 31744
      %v80 = vsel %vm78, %v69, 0
      %v83 = vsel %vm36, %v70, 0
      %85 = vmatprep.subr.mxu0 0.0
      %86 = vmatpush1.msra.mxu0 %v83
      %87 = vmatprep.subr.mxu0 0.0
      %88 = vmatpush1.msra.mxu0 0.0
      %89 = vmatprep.subr.mxu0 0.0
      %90 = vmatpush1.msra.mxu0 0.0
      %91 = vmatprep.subr.mxu0 0.0
      %92 = vmatpush1.msra.mxu0 0.0
      %93 = vmatprep.subr.mxu0 0.0
      %94 = vmatpush1.msra.mxu0 0.0
      %95 = vmatprep.subr.mxu0 0.0
      %96 = vmatpush1.msra.mxu0 0.0
      %97 = vmatprep.subr.mxu0 0.0
      %98 = vmatpush1.msra.mxu0 0.0
      %99 = vmatprep.subr.mxu0 0.0
      %100 = vmatpush1.msra.mxu0 0.0
      %101 = vmatprep.subr.mxu0 0.0
      %102 = vmatpush1.msra.mxu0 0.0
      %103 = vmatprep.subr.mxu0 0.0
      %104 = vmatpush1.msra.mxu0 0.0
      %105 = vmatprep.subr.mxu0 0.0
      %106 = vmatpush1.msra.mxu0 0.0
      %107 = vmatprep.subr.mxu0 0.0
      %108 = vmatpush1.msra.mxu0 0.0
      %109 = vmatprep.subr.mxu0 0.0
      %110 = vmatpush1.msra.mxu0 0.0
      %111 = vmatprep.subr.mxu0 0.0
      %112 = vmatpush1.msra.mxu0 0.0
      %113 = vmatprep.subr.mxu0 0.0
      %114 = vmatpush1.msra.mxu0 0.0
      %115 = vmatprep.subr.mxu0 0.0
      %116 = vmatpush1.msra.mxu0 0.0
      %117 = vmatprep.subr.mxu0 0.0
      %118 = vmatpush1.msra.mxu0 0.0
      %119 = vmatprep.subr.mxu0 0.0
      %120 = vmatpush1.msra.mxu0 0.0
      %121 = vmatprep.subr.mxu0 0.0
      %122 = vmatpush1.msra.mxu0 0.0
      %123 = vmatprep.subr.mxu0 0.0
      %124 = vmatpush1.msra.mxu0 0.0
      %125 = vmatprep.subr.mxu0 0.0
      %126 = vmatpush1.msra.mxu0 0.0
      %127 = vmatprep.subr.mxu0 0.0
      %128 = vmatpush1.msra.mxu0 0.0
      %129 = vmatprep.subr.mxu0 0.0
      %130 = vmatpush1.msra.mxu0 0.0
      %131 = vmatprep.subr.mxu0 0.0
      %132 = vmatpush1.msra.mxu0 0.0
      %133 = vmatprep.subr.mxu0 0.0
      %134 = vmatpush1.msra.mxu0 0.0
      %135 = vmatprep.subr.mxu0 0.0
      %136 = vmatpush1.msra.mxu0 0.0
      %137 = vmatprep.subr.mxu0 0.0
      %138 = vmatpush1.msra.mxu0 0.0
      %139 = vmatprep.subr.mxu0 0.0
      %140 = vmatpush1.msra.mxu0 0.0
      %141 = vmatprep.subr.mxu0 0.0
      %142 = vmatpush1.msra.mxu0 0.0
      %143 = vmatprep.subr.mxu0 0.0
      %144 = vmatpush1.msra.mxu0 0.0
      %145 = vmatprep.subr.mxu0 0.0
      %146 = vmatpush1.msra.mxu0 0.0
      %147 = vmatprep.subr.mxu0 0.0
      %148 = vmatpush1.msra.mxu0 0.0
      %149 = vmatprep.mubr.f32.mxu0 0.0
      %150 = vmatmul.mubr.f32.gmra.mrb[0].mxu0 %v80
      %v151 = vpop.f32.mrb[0].mxu0
      %v152 = vadd.f32 %v76, %v151
      %v153 = vpop.f32.mrb[0].mxu0
      %154 = vdwg.mxu0
      %v155 = vmax.f32 %v152, 0.0
      %v156 = vld [vmem:[%s3] sm:$0xff]
      %v157 = vld [vmem:[%s3 + $0x8] sm:$0xff]
      %v158 = vld [vmem:[%s3 + $0x10] sm:$0xff]
      %v159 = vld [vmem:[%s3 + $0x18] sm:$0xff]
      %v160 = vld [vmem:[%s4] sm:$0x1]
      %v162 = vlaneseq
      %v163 = vshrl.u32 %v162, 7
      %v164 = vsub.s32 0, %v163
      %v165 = vrot.slane %v160, %v164
      %vm167 = vcmask 261120
      %v169 = vsel %vm167, %v155, 0
      %171 = vmatprep.subr.mxu0 0.0
      %172 = vmatpush1.msra.mxu0 %v156
      %173 = vmatprep.subr.mxu0 0.0
      %174 = vmatpush1.msra.mxu0 %v157
      %175 = vmatprep.subr.mxu0 0.0
      %176 = vmatpush1.msra.mxu0 %v158
      %177 = vmatprep.subr.mxu0 0.0
      %178 = vmatpush1.msra.mxu0 %v159
      %179 = vmatprep.subr.mxu0 0.0
      %180 = vmatpush1.msra.mxu0 0.0
      %181 = vmatprep.subr.mxu0 0.0
      %182 = vmatpush1.msra.mxu0 0.0
      %183 = vmatprep.subr.mxu0 0.0
      %184 = vmatpush1.msra.mxu0 0.0
      %185 = vmatprep.subr.mxu0 0.0
      %186 = vmatpush1.msra.mxu0 0.0
      %187 = vmatprep.subr.mxu0 0.0
      %188 = vmatpush1.msra.mxu0 0.0
      %189 = vmatprep.subr.mxu0 0.0
      %190 = vmatpush1.msra.mxu0 0.0
      %191 = vmatprep.subr.mxu0 0.0
      %192 = vmatpush1.msra.mxu0 0.0
      %193 = vmatprep.subr.mxu0 0.0
      %194 = vmatpush1.msra.mxu0 0.0
      %195 = vmatprep.subr.mxu0 0.0
      %196 = vmatpush1.msra.mxu0 0.0
      %197 = vmatprep.subr.mxu0 0.0
      %198 = vmatpush1.msra.mxu0 0.0
      %199 = vmatprep.subr.mxu0 0.0
      %200 = vmatpush1.msra.mxu0 0.0
      %201 = vmatprep.subr.mxu0 0.0
      %202 = vmatpush1.msra.mxu0 0.0
      %203 = vmatprep.subr.mxu0 0.0
      %204 = vmatpush1.msra.mxu0 0.0
      %205 = vmatprep.subr.mxu0 0.0
      %206 = vmatpush1.msra.mxu0 0.0
      %207 = vmatprep.subr.mxu0 0.0
      %208 = vmatpush1.msra.mxu0 0.0
      %209 = vmatprep.subr.mxu0 0.0
      %210 = vmatpush1.msra.mxu0 0.0
      %211 = vmatprep.subr.mxu0 0.0
      %212 = vmatpush1.msra.mxu0 0.0
      %213 = vmatprep.subr.mxu0 0.0
      %214 = vmatpush1.msra.mxu0 0.0
      %215 = vmatprep.subr.mxu0 0.0
      %216 = vmatpush1.msra.mxu0 0.0
      %217 = vmatprep.subr.mxu0 0.0
      %218 = vmatpush1.msra.mxu0 0.0
      %219 = vmatprep.subr.mxu0 0.0
      %220 = vmatpush1.msra.mxu0 0.0
      %221 = vmatprep.subr.mxu0 0.0
      %222 = vmatpush1.msra.mxu0 0.0
      %223 = vmatprep.subr.mxu0 0.0
      %224 = vmatpush1.msra.mxu0 0.0
      %225 = vmatprep.subr.mxu0 0.0
      %226 = vmatpush1.msra.mxu0 0.0
      %227 = vmatprep.subr.mxu0 0.0
      %228 = vmatpush1.msra.mxu0 0.0
      %229 = vmatprep.subr.mxu0 0.0
      %230 = vmatpush1.msra.mxu0 0.0
      %231 = vmatprep.subr.mxu0 0.0
      %232 = vmatpush1.msra.mxu0 0.0
      %233 = vmatprep.subr.mxu0 0.0
      %234 = vmatpush1.msra.mxu0 0.0
      %235 = vmatprep.mubr.f32.mxu0 0.0
      %236 = vmatmul.mubr.f32.gmra.mrb[0].mxu0 %v169
      %v237 = vpop.f32.mrb[0].mxu0
      %v238 = vadd.f32 %v165, %v237
      %v239 = vpop.f32.mrb[0].mxu0
      %240 = vdwg.mxu0
      %vm241 = vcmask 9216
      %242 = vst.msk [vmem:[#allocation3] sm:$0x3] %vm241, %v238
    $region29: #{tpu_custom_call.1} parent=1 // pred_fallthru
      _
    // Predicated region
    $region30: #{tpu_custom_call.1} parent=1 // pred_check
      _
    $region31: #{tpu_custom_call.1} parent=1 // pred_check_branch
      %244 = sbr.rel (0) target = $region33
    $region32: #{tpu_custom_call.1} parent=1 // pred_region
      %s246 = ssub.s32 32, 32
      %247 = vsyncadd [#allocation4], %s246
      %s249 = sshll.u32 [#allocation3], 4
      %s250 = int_to_ptr.vmem [resolvable:$true] %s249
      %252 = dma.vmem_to_hbm [thread:$0]  %s250, 32, %s5, [#allocation4]
    $region33: #{tpu_custom_call.1} parent=1 // pred_fallthru
      _
    // Predicated region
    $region34: #{tpu_custom_call.1} parent=1 // pred_check
      _
    $region35: #{tpu_custom_call.1} parent=1 // pred_check_branch
      %254 = sbr.rel (0) target = $region37
    $region36: #{tpu_custom_call.1} parent=1 // pred_region
      %255 = dma.done [#allocation4], 32
    $region37: #{tpu_custom_call.1} parent=1 // pred_fallthru
      _
    %256 = vsyncpa [#allocation4], 1

</llo_original>
